<compile_context>
chip_gen: v7x
topology: tpu7x:2x2x1
jax: 0.10.0
libtpu: 0.0.40
codegen_flags: <defaults>
</compile_context>

<pallas_src>
import functools

import jax
import jax.numpy as jnp
from jax import lax
from jax.experimental import pallas as pl
from jax.experimental.pallas import tpu as pltpu

BN_EPS = 1e-5
LANE = 128                       # pad channels to a multiple of the lane width
M_CHUNK = 256                    # target MXU-M rows per live f32 accumulator chunk
_VMEM_LIMIT = 32 * 1024 * 1024   # conservative scoped-VMEM budget (safe on v7x's 64 MiB)


def _round_up(x, m):
    return (x + m - 1) // m * m


def _pad_last(a, target):
    pad = target - a.shape[-1]
    if pad == 0:
        return a
    return jnp.pad(a, [(0, 0)] * (a.ndim - 1) + [(0, pad)])


def _weight_to_2d(w_oihw, cin_p, cout_p, dtype):
    """(Co, Ci, 3, 3) -> (9*cin_p, cout_p) with rows in (kh, kw, ci) tap order."""
    co, ci = w_oihw.shape[0], w_oihw.shape[1]
    w_t = jnp.transpose(w_oihw, (2, 3, 1, 0))                    # (3, 3, Ci, Co)
    w_t = jnp.pad(w_t, ((0, 0), (0, 0), (0, cin_p - ci), (0, cout_p - co)))
    return w_t.reshape(9 * cin_p, cout_p).astype(dtype)


def _pad_hw(x, off, hp, wp):
    """Zero-pad an (h, w, c) register value to (hp, wp, c) with `off` leading
    rows/cols of padding.  Built with concatenate so the VMEM slab receives ONE
    aligned full store (no zero-fill followed by a masked interior re-store)."""
    h, w, c = x.shape
    dt = x.dtype
    parts = []
    if off:
        parts.append(jnp.zeros((off, w, c), dt))
    parts.append(x)
    if hp - h - off:
        parts.append(jnp.zeros((hp - h - off, w, c), dt))
    x = jnp.concatenate(parts, axis=0) if len(parts) > 1 else x
    parts = []
    if off:
        parts.append(jnp.zeros((hp, off, c), dt))
    parts.append(x)
    if wp - w - off:
        parts.append(jnp.zeros((hp, wp - w - off, c), dt))
    return jnp.concatenate(parts, axis=1) if len(parts) > 1 else x


# ---------------------------------------------------------------------------
# Kernel 1: per-channel batch statistics of x (row-chunked reduction).
# ---------------------------------------------------------------------------
def _bn_stats_kernel(x_ref, sum_ref, sq_ref):
    @pl.when(pl.program_id(0) == 0)
    def _():
        sum_ref[...] = jnp.zeros_like(sum_ref)
        sq_ref[...] = jnp.zeros_like(sq_ref)

    x = x_ref[...].astype(jnp.float32)            # (rows_blk, Cp)
    sum_ref[...] += jnp.sum(x, axis=0, keepdims=True)
    sq_ref[...] += jnp.sum(x * x, axis=0, keepdims=True)


def _bn_stats(x_p):
    """Per-channel (sum, sum_sq) of an NHWC lane-padded activation."""
    n, h, w, cp = x_p.shape
    rows = n * h * w
    x2d = x_p.reshape(rows, cp)                   # contiguous -> free reshape
    rblk = rows
    for cand in (4096, 2048, 1024, 512, 256, 128, 64, 32, 16, 8):
        if rows % cand == 0:
            rblk = cand
            break
    return pl.pallas_call(
        _bn_stats_kernel,
        out_shape=(jax.ShapeDtypeStruct((1, cp), jnp.float32),
                   jax.ShapeDtypeStruct((1, cp), jnp.float32)),
        grid=(rows // rblk,),
        in_specs=[pl.BlockSpec((rblk, cp), lambda i: (i, 0))],
        out_specs=(pl.BlockSpec((1, cp), lambda i: (0, 0)),
                   pl.BlockSpec((1, cp), lambda i: (0, 0))),
        compiler_params=pltpu.CompilerParams(
            dimension_semantics=("arbitrary",),
            vmem_limit_bytes=_VMEM_LIMIT),
    )(x2d)


def _scale_shift_from_sums(s, sq, count, gamma, beta, cpad):
    """Fold batch stats + affine params into per-channel scale/shift (kept f32)."""
    mean = s / count
    var = sq / count - mean * mean                # biased batch variance
    gamma_p = _pad_last(gamma.reshape(1, -1).astype(jnp.float32), cpad)
    beta_p = _pad_last(beta.reshape(1, -1).astype(jnp.float32), cpad)
    scale = gamma_p * lax.rsqrt(var + BN_EPS)
    shift = beta_p - mean * scale
    return scale, shift                           # f32: tiny operands, full BN precision


# ---------------------------------------------------------------------------
# Shared conv helper: one M-chunk of a 3x3 conv as 9 shifted MXU matmuls.
# ---------------------------------------------------------------------------
def _conv3x3_chunk(slab_ref, w_ref, oh0, ohc, wo, cin, cout, stride, matmul_dtype):
    acc = jnp.zeros((ohc * wo, cout), jnp.float32)
    for kh in range(3):
        for kw in range(3):
            if stride == 1:
                patch = slab_ref[oh0 + kh:oh0 + kh + ohc, kw:kw + wo, :]
            else:
                patch = slab_ref[pl.ds(stride * oh0 + kh, ohc, stride=stride),
                                 pl.ds(kw, wo, stride=stride), :]
            tap = kh * 3 + kw
            acc = acc + jnp.dot(
                patch.reshape(ohc * wo, cin).astype(matmul_dtype),
                w_ref[tap * cin:(tap + 1) * cin, :].astype(matmul_dtype),
                preferred_element_type=jnp.float32)
    return acc


# ---------------------------------------------------------------------------
# Kernel 2 (stage 1): shortcut conv + [BN0+ReLU -> conv1] + BN1 stats epilogue.
# ---------------------------------------------------------------------------
def _stage1_kernel(*refs, stride, has_shortcut, matmul_dtype, m_chunk):
    if has_shortcut:
        (x_ref, scale_ref, shift_ref, w1_ref, wsc_ref,
         out1_ref, sum_ref, sq_ref, sc_ref, slab_act, slab_raw) = refs
    else:
        (x_ref, scale_ref, shift_ref, w1_ref,
         out1_ref, sum_ref, sq_ref, slab_act) = refs
        wsc_ref = sc_ref = slab_raw = None

    _, h, w, cp = x_ref.shape
    hp, wp, _ = slab_act.shape
    _, ho, wo, cop = out1_ref.shape
    off = 1 if stride == 1 else 0     # stride 1: pad (1,1,1,1); stride 2: (0,1,0,1)

    # Resident BN1-statistics accumulators: init on the first batch element.
    @pl.when(pl.program_id(0) == 0)
    def _():
        sum_ref[...] = jnp.zeros_like(sum_ref)
        sq_ref[...] = jnp.zeros_like(sq_ref)

    # BN0 scale/shift + ReLU + zero-pad, built once per batch element and written
    # to the VMEM slab(s) with a single aligned full-slab store each.
    x = x_ref[...].reshape(h, w, cp).astype(jnp.float32)
    act = jnp.maximum(x * scale_ref[...] + shift_ref[...], 0.0)
    slab_act[...] = _pad_hw(act, off, hp, wp)
    if has_shortcut:
        slab_raw[...] = _pad_hw(x, off, hp, wp)

    # conv1 (and shortcut conv) as 9 shifted MXU matmuls, M-chunked so the live
    # f32 accumulator stays bounded (~m_chunk x cop).
    ho_chunk = max(1, min(ho, m_chunk // wo))
    for oh0 in range(0, ho, ho_chunk):
        ohc = min(ho_chunk, ho - oh0)
        acc1 = _conv3x3_chunk(slab_act, w1_ref, oh0, ohc, wo, cp, cop,
                              stride, matmul_dtype)
        out1_ref[:, oh0:oh0 + ohc, :, :] = (
            acc1.reshape(1, ohc, wo, cop).astype(out1_ref.dtype))
        # Fused BN1-statistics epilogue: removes a whole HBM pass over `out1`.
        sum_ref[...] += jnp.sum(acc1, axis=0, keepdims=True)
        sq_ref[...] += jnp.sum(acc1 * acc1, axis=0, keepdims=True)
        if has_shortcut:
            acc_sc = _conv3x3_chunk(slab_raw, wsc_ref, oh0, ohc, wo, cp, cop,
                                    stride, matmul_dtype)
            sc_ref[:, oh0:oh0 + ohc, :, :] = (
                acc_sc.reshape(1, ohc, wo, cop).astype(sc_ref.dtype))


def _stage1(x_p, w1, w_sc, scale0, shift0, stride, compute_dtype):
    n, h, w, cp = x_p.shape
    co = w1.shape[0]
    cop = _round_up(co, LANE)
    has_shortcut = w_sc is not None
    if stride == 1:
        hp, wp = h + 2, w + 2
    elif stride == 2:
        hp, wp = h + 1, w + 1
    else:
        raise ValueError('Unsupported `stride`.')
    ho = (hp - 3) // stride + 1
    wo = (wp - 3) // stride + 1

    in_specs = [
        pl.BlockSpec((1, h, w, cp), lambda nb: (nb, 0, 0, 0)),
        pl.BlockSpec((1, cp), lambda nb: (0, 0)),
        pl.BlockSpec((1, cp), lambda nb: (0, 0)),
        # Constant index map -> weight block stays VMEM-resident across the grid.
        pl.BlockSpec((9 * cp, cop), lambda nb: (0, 0)),
    ]
    operands = [x_p, scale0, shift0, _weight_to_2d(w1, cp, cop, compute_dtype)]
    out_shapes = [
        jax.ShapeDtypeStruct((n, ho, wo, cop), compute_dtype),   # out1
        jax.ShapeDtypeStruct((1, cop), jnp.float32),             # sum(out1)
        jax.ShapeDtypeStruct((1, cop), jnp.float32),             # sum(out1^2)
    ]
    out_specs = [
        pl.BlockSpec((1, ho, wo, cop), lambda nb: (nb, 0, 0, 0)),
        pl.BlockSpec((1, cop), lambda nb: (0, 0)),
        pl.BlockSpec((1, cop), lambda nb: (0, 0)),
    ]
    # Slabs kept f32 so stride-2 sublane-strided tap reads stay on the
    # well-supported unpacked path; MXU operands are still cast to compute_dtype.
    scratch = [pltpu.VMEM((hp, wp, cp), jnp.float32)]
    if has_shortcut:
        in_specs.append(pl.BlockSpec((9 * cp, cop), lambda nb: (0, 0)))
        operands.append(_weight_to_2d(w_sc, cp, cop, compute_dtype))
        out_shapes.append(jax.ShapeDtypeStruct((n, ho, wo, cop), compute_dtype))
        out_specs.append(pl.BlockSpec((1, ho, wo, cop), lambda nb: (nb, 0, 0, 0)))
        scratch.append(pltpu.VMEM((hp, wp, cp), jnp.float32))

    kernel = functools.partial(
        _stage1_kernel, stride=stride, has_shortcut=has_shortcut,
        matmul_dtype=compute_dtype, m_chunk=M_CHUNK)
    outs = pl.pallas_call(
        kernel,
        out_shape=tuple(out_shapes),
        grid=(n,),
        in_specs=in_specs,
        out_specs=tuple(out_specs),
        scratch_shapes=scratch,
        compiler_params=pltpu.CompilerParams(
            # Batch axis accumulates the resident BN1-stat blocks -> sequential.
            dimension_semantics=("arbitrary",),
            vmem_limit_bytes=_VMEM_LIMIT),
    )(*operands)
    if has_shortcut:
        out1, s1, q1, shortcut = outs
    else:
        (out1, s1, q1), shortcut = outs, None
    return out1, s1, q1, shortcut


# ---------------------------------------------------------------------------
# Kernel 3 (stage 2): BN1+ReLU -> pad -> conv2 -> + residual.
# ---------------------------------------------------------------------------
def _stage2_kernel(x_ref, scale_ref, shift_ref, w_ref, res_ref, y_ref, slab,
                   *, matmul_dtype, m_chunk):
    _, ho, wo, cop = y_ref.shape
    hp, wp, _ = slab.shape

    x = x_ref[...].reshape(ho, wo, cop).astype(jnp.float32)
    act = jnp.maximum(x * scale_ref[...] + shift_ref[...], 0.0)
    slab[...] = _pad_hw(act, 1, hp, wp)          # single aligned full-slab store

    ho_chunk = max(1, min(ho, m_chunk // wo))
    for oh0 in range(0, ho, ho_chunk):
        ohc = min(ho_chunk, ho - oh0)
        acc = _conv3x3_chunk(slab, w_ref, oh0, ohc, wo, cop, cop, 1, matmul_dtype)
        acc = acc + (res_ref[:, oh0:oh0 + ohc, :, :]
                     .reshape(ohc * wo, cop).astype(jnp.float32))
        y_ref[:, oh0:oh0 + ohc, :, :] = (
            acc.reshape(1, ohc, wo, cop).astype(y_ref.dtype))


def _stage2(out1, scale1, shift1, w2, residual, compute_dtype):
    n, ho, wo, cop = out1.shape
    assert residual.shape == (n, ho, wo, cop), (residual.shape, out1.shape)
    kernel = functools.partial(_stage2_kernel, matmul_dtype=compute_dtype,
                               m_chunk=M_CHUNK)
    return pl.pallas_call(
        kernel,
        out_shape=jax.ShapeDtypeStruct((n, ho, wo, cop), compute_dtype),
        grid=(n,),
        in_specs=[
            pl.BlockSpec((1, ho, wo, cop), lambda nb: (nb, 0, 0, 0)),
            pl.BlockSpec((1, cop), lambda nb: (0, 0)),
            pl.BlockSpec((1, cop), lambda nb: (0, 0)),
            pl.BlockSpec((9 * cop, cop), lambda nb: (0, 0)),     # resident weights
            pl.BlockSpec((1, ho, wo, cop), lambda nb: (nb, 0, 0, 0)),
        ],
        out_specs=pl.BlockSpec((1, ho, wo, cop), lambda nb: (nb, 0, 0, 0)),
        scratch_shapes=[pltpu.VMEM((ho + 2, wo + 2, cop), jnp.float32)],
        compiler_params=pltpu.CompilerParams(
            dimension_semantics=("parallel",),   # no cross-batch accumulation here
            vmem_limit_bytes=_VMEM_LIMIT),
    )(out1, scale1, shift1, _weight_to_2d(w2, cop, cop, compute_dtype), residual)


# ---------------------------------------------------------------------------
# Block forward (matches _PreActBlock.forward, training-mode BatchNorm stats)
# ---------------------------------------------------------------------------
def preact_block_forward(x_nchw, params, stride, has_shortcut,
                         compute_dtype=jnp.bfloat16):
    """compute_dtype: dtype of MXU operands and of activations stored in HBM
    between kernels (bf16 default for v6e/v7x throughput + halved DMA bytes;
    pass jnp.float32 for exact validation).  All accumulation, BN statistics and
    scale/shift math stays f32."""
    c_in, c_out = params['w1'].shape[1], params['w1'].shape[0]
    # TODO(synk): for a full network, keep activations NHWC + lane-padded across
    # blocks and do this transpose/pad once at the network boundary.
    x = jnp.transpose(x_nchw, (0, 2, 3, 1))                     # NCHW -> NHWC
    cp = _round_up(c_in, LANE)
    x_p = _pad_last(x, cp).astype(compute_dtype)
    n, h, w, _ = x_p.shape

    # BN0 batch statistics (the only standalone reduction pass; BN1 stats come
    # out of stage 1's fused epilogue).
    s0, q0 = _bn_stats(x_p)
    scale0, shift0 = _scale_shift_from_sums(
        s0, q0, float(n * h * w), params['bn0_gamma'], params['bn0_beta'], cp)
    # TODO(synk): running_mean / running_var (momentum=0.01) training-state
    # updates of nn.BatchNorm2d are not materialized here.

    # Stage 1: shortcut conv (raw x) + conv1 (BN0+ReLU fused on the input path)
    # + BN1 sum / sum-of-squares epilogue -- one HBM read of x, one kernel.
    out1, s1, q1, shortcut = _stage1(
        x_p, params['w1'], params['w_sc'] if has_shortcut else None,
        scale0, shift0, stride, compute_dtype)
    _, ho, wo, cop = out1.shape
    if not has_shortcut:
        assert stride == 1 and c_in == c_out, (
            'identity shortcut requires stride == 1 and in_planes == out_planes')
        shortcut = x_p

    scale1, shift1 = _scale_shift_from_sums(
        s1, q1, float(n * ho * wo), params['bn1_gamma'], params['bn1_beta'], cop)

    # Stage 2: BN1+ReLU + pad + conv2 + residual add, fused.
    y = _stage2(out1, scale1, shift1, params['w2'], shortcut, compute_dtype)

    y = y[..., :c_out].astype(x_nchw.dtype)                     # drop lane padding
    return jnp.transpose(y, (0, 3, 1, 2))                       # NHWC -> NCHW


# ---------------------------------------------------------------------------
# Pure-JAX reference (verification only)
# ---------------------------------------------------------------------------
def _ref_forward(x, params, stride, has_shortcut):
    def bnr(x, g, b):
        mean = x.mean(axis=(0, 2, 3), keepdims=True)
        var = ((x - mean) ** 2).mean(axis=(0, 2, 3), keepdims=True)
        y = (x - mean) / jnp.sqrt(var + BN_EPS) * g.reshape(1, -1, 1, 1) + b.reshape(1, -1, 1, 1)
        return jnp.maximum(y, 0.0)

    def pad(x, s):
        if s == 1:
            return jnp.pad(x, ((0, 0), (0, 0), (1, 1), (1, 1)))
        return jnp.pad(x, ((0, 0), (0, 0), (0, 1), (0, 1)))

    def conv(x, w, s):
        return lax.conv_general_dilated(x, w, (s, s), 'VALID',
                                        dimension_numbers=('NCHW', 'OIHW', 'NCHW'))

    out = bnr(x, params['bn0_gamma'], params['bn0_beta'])
    shortcut = conv(pad(x, stride), params['w_sc'], stride) if has_shortcut else x
    out = conv(pad(out, stride), params['w1'], stride)
    out = bnr(out, params['bn1_gamma'], params['bn1_beta'])
    out = conv(jnp.pad(out, ((0, 0), (0, 0), (1, 1), (1, 1))), params['w2'], 1)
    return out + shortcut


def _make_params(key, in_planes, out_planes):
    ks = jax.random.split(key, 7)
    return {
        'bn0_gamma': 1.0 + 0.1 * jax.random.normal(ks[0], (in_planes,), jnp.float32),
        'bn0_beta': 0.1 * jax.random.normal(ks[1], (in_planes,), jnp.float32),
        'w1': 0.1 * jax.random.normal(ks[2], (out_planes, in_planes, 3, 3), jnp.float32),
        'bn1_gamma': 1.0 + 0.1 * jax.random.normal(ks[3], (out_planes,), jnp.float32),
        'bn1_beta': 0.1 * jax.random.normal(ks[4], (out_planes,), jnp.float32),
        'w2': 0.1 * jax.random.normal(ks[5], (out_planes, out_planes, 3, 3), jnp.float32),
        'w_sc': 0.1 * jax.random.normal(ks[6], (out_planes, in_planes, 3, 3), jnp.float32),
    }


if __name__ == "__main__":
    key = jax.random.PRNGKey(0)
    configs = [
        # (N, in_planes, out_planes, H, W, stride)
        (2, 4, 8, 16, 16, 2),    # downsampling block with conv shortcut
        (2, 8, 8, 16, 16, 1),    # identity-shortcut block
    ]
    for idx, (n, cin, cout, h, w, stride) in enumerate(configs):
        kx, kp, key = jax.random.split(key, 3)
        x = jax.random.normal(kx, (n, cin, h, w), jnp.float32)
        params = _make_params(kp, cin, cout)
        has_shortcut = (stride != 1) or (cin != cout)
        ref = _ref_forward(x, params, stride, has_shortcut)

        # f32 path (exact validation, tight tolerance) and bf16 path (fast path,
        # tolerance covers bf16 rounding through two convs + BN amplification).
        for dt, tol in ((jnp.float32, 5e-3), (jnp.bfloat16, 1e-1)):
            out = jax.block_until_ready(
                preact_block_forward(x, params, stride, has_shortcut,
                                     compute_dtype=dt))
            assert out.shape == ref.shape, (out.shape, ref.shape)
            err = float(jnp.max(jnp.abs(out - ref)))
            assert err < tol, f"config {idx} dtype {dt}: max abs error {err}"
    print("KERNEL_OK")
</pallas_src>

<mosaic_0001>
module attributes {stable_mosaic.version = 11 : i64} {
  func.func @_bn_stats_kernel(%arg0: i32, %arg1: memref<512x128xf32, #tpu.memory_space<vmem>>, %arg2: memref<1x128xf32, #tpu.memory_space<vmem>>, %arg3: memref<1x128xf32, #tpu.memory_space<vmem>>) attributes {dimension_semantics = [#tpu.dimension_semantics<arbitrary>], iteration_bounds = array<i64: 1>, scalar_prefetch = 0 : i64, scratch_operands = 0 : i64, tpu.core_type = #tpu.core_type<tc>, window_params = [{transform_indices = @transform_0, window_bounds = array<i64: 512, 128>}, {pipeline_mode = #tpu.pipeline_mode<synchronous>, transform_indices = @transform_1, window_bounds = array<i64: 1, 128>}, {pipeline_mode = #tpu.pipeline_mode<synchronous>, transform_indices = @transform_2, window_bounds = array<i64: 1, 128>}]} {
    %c0_i32 = arith.constant 0 : i32
    %0 = arith.cmpi eq, %arg0, %c0_i32 : i32
    %1 = arith.extui %0 : i1 to i32
    %c0_i32_0 = arith.constant 0 : i32
    %2 = arith.cmpi ne, %1, %c0_i32_0 : i32
    scf.if %2 {
      %cst_11 = arith.constant 0.000000e+00 : f32
      %15 = vector.broadcast %cst_11 : f32 to vector<1x128xf32>
      %c0_12 = arith.constant 0 : index
      %c0_13 = arith.constant 0 : index
      %16 = vector.load %arg2[%c0_12, %c0_13] : memref<1x128xf32, #tpu.memory_space<vmem>>, vector<1x128xf32>
      tpu.vector_store %arg2[%c0_12, %c0_13], %15 {strides = array<i32>} : memref<1x128xf32, #tpu.memory_space<vmem>>, vector<1x128xf32>,
      %cst_14 = arith.constant 0.000000e+00 : f32
      %17 = vector.broadcast %cst_14 : f32 to vector<1x128xf32>
      %c0_15 = arith.constant 0 : index
      %c0_16 = arith.constant 0 : index
      %18 = vector.load %arg3[%c0_15, %c0_16] : memref<1x128xf32, #tpu.memory_space<vmem>>, vector<1x128xf32>
      tpu.vector_store %arg3[%c0_15, %c0_16], %17 {strides = array<i32>} : memref<1x128xf32, #tpu.memory_space<vmem>>, vector<1x128xf32>,
    } else {
    }
    %c0 = arith.constant 0 : index
    %c0_1 = arith.constant 0 : index
    %3 = vector.load %arg1[%c0, %c0_1] : memref<512x128xf32, #tpu.memory_space<vmem>>, vector<512x128xf32>
    %c0_2 = arith.constant 0 : index
    %c0_3 = arith.constant 0 : index
    %4 = vector.load %arg2[%c0_2, %c0_3] : memref<1x128xf32, #tpu.memory_space<vmem>>, vector<1x128xf32>
    %cst = arith.constant dense<0.000000e+00> : vector<128xf32>
    %5 = vector.multi_reduction <add>, %3, %cst [0] : vector<512x128xf32> to vector<128xf32>
    %6 = vector.shape_cast %5 : vector<128xf32> to vector<1x128xf32>
    %7 = arith.addf %4, %6 : vector<1x128xf32>
    %c0_4 = arith.constant 0 : index
    %c0_5 = arith.constant 0 : index
    %8 = vector.load %arg2[%c0_4, %c0_5] : memref<1x128xf32, #tpu.memory_space<vmem>>, vector<1x128xf32>
    tpu.vector_store %arg2[%c0_4, %c0_5], %7 {strides = array<i32>} : memref<1x128xf32, #tpu.memory_space<vmem>>, vector<1x128xf32>,
    %c0_6 = arith.constant 0 : index
    %c0_7 = arith.constant 0 : index
    %9 = vector.load %arg3[%c0_6, %c0_7] : memref<1x128xf32, #tpu.memory_space<vmem>>, vector<1x128xf32>
    %10 = arith.mulf %3, %3 : vector<512x128xf32>
    %cst_8 = arith.constant dense<0.000000e+00> : vector<128xf32>
    %11 = vector.multi_reduction <add>, %10, %cst_8 [0] : vector<512x128xf32> to vector<128xf32>
    %12 = vector.shape_cast %11 : vector<128xf32> to vector<1x128xf32>
    %13 = arith.addf %9, %12 : vector<1x128xf32>
    %c0_9 = arith.constant 0 : index
    %c0_10 = arith.constant 0 : index
    %14 = vector.load %arg3[%c0_9, %c0_10] : memref<1x128xf32, #tpu.memory_space<vmem>>, vector<1x128xf32>
    tpu.vector_store %arg3[%c0_9, %c0_10], %13 {strides = array<i32>} : memref<1x128xf32, #tpu.memory_space<vmem>>, vector<1x128xf32>,
    return
  }
  func.func @transform_0(%arg0: i32) -> (i32, i32) {
    %c0_i32 = arith.constant 0 : i32
    %c0_i32_0 = arith.constant 0 : i32
    return %arg0, %c0_i32 : i32, i32
  }
  func.func @transform_1(%arg0: i32) -> (i32, i32) {
    %c0_i32 = arith.constant 0 : i32
    %c0_i32_0 = arith.constant 0 : i32
    %c0_i32_1 = arith.constant 0 : i32
    return %c0_i32, %c0_i32_0 : i32, i32
  }
  func.func @transform_2(%arg0: i32) -> (i32, i32) {
    %c0_i32 = arith.constant 0 : i32
    %c0_i32_0 = arith.constant 0 : i32
    %c0_i32_1 = arith.constant 0 : i32
    return %c0_i32, %c0_i32_0 : i32, i32
  }
}

</mosaic_0001>

<llo_original>
// kernel: tpu_custom_call.1
$region0: #{tpu_custom_call.1}
  #allocation0 [shape = 'u32[]', space=smem, size = 0x4, offset = 0x4, fixed_abs, tag = 'smem constant byte address 0x4 - core index']
  #allocation1 [shape = 'u32[144,128]{1,0:T(1,128)}', space=vmem, size = 0x12000, scoped, tag = 'internal scratch']
  %s0 = inlined_call_operand.hbm [shape: f32[512,128], index: 0, kind: input, shape index: {}]
  %s1 = inlined_call_operand.hbm [shape: f32[1,128], index: 1, kind: output, shape index: {0}]
  %s2 = inlined_call_operand.hbm [shape: f32[1,128], index: 2, kind: output, shape index: {1}]
  %3 = xla_tuple %s1, %s2
  %s4 = sld [smem:[#allocation0]]
  $region30: #{tpu_custom_call.1} parent=0
    _
  %s6 = ssub.s32 1, %s4
  %s7 = scalar_select 0, %s6, %s4
  $region1: #{tpu_custom_call.1} parent=0
    #allocation2 [shape = 'u8[262144]{0}', space=vmem, size = 0x40000, scoped, tag = 'input window, operand 0, single buffered']
    #allocation3 [shape = 's32[1]{0}', space=sflag, size = 0x4, scoped, tag = 'scoped memory for tpu_custom_call.1']
    #allocation4 [shape = 's32[1]{0}', space=sflag, size = 0x4, scoped, tag = 'scoped memory for tpu_custom_call.1']
    #allocation5 [shape = 'u8[512]{0}', space=vmem, size = 0x400, scoped, tag = 'output window, operand 0, single buffered']
    #allocation6 [shape = 'u8[512]{0}', space=vmem, size = 0x400, scoped, tag = 'output window, operand 1, single buffered']
    #allocation7 [shape = 's32[1]{0}', space=sflag, size = 0x4, scoped, tag = 'scoped memory for tpu_custom_call.1']
    %8 = vsyncpa [#allocation3], 0
    %9 = vsyncpa [#allocation4], 0
    %10 = vsyncpa [#allocation7], 0
    // Predicated region
    $region2: #{tpu_custom_call.1} parent=1 // pred_check
      _
    $region3: #{tpu_custom_call.1} parent=1 // pred_check_branch
      %12 = sbr.rel (0) target = $region5
    $region4: #{tpu_custom_call.1} parent=1 // pred_region
      %s14 = ssub.s32 8192, 8192
      %15 = vsyncadd [#allocation3], %s14
      %s16 = sshll.u32 [#allocation2], 4
      %s17 = int_to_ptr.vmem [resolvable:$true] %s16
      %22 = dma.hbm_to_vmem [thread:$0]  %s0, 8192, %s17, [#allocation3], 128, 128, 8
    $region5: #{tpu_custom_call.1} parent=1 // pred_fallthru
      _
    // Predicated region
    $region6: #{tpu_custom_call.1} parent=1 // pred_check
      _
    $region7: #{tpu_custom_call.1} parent=1 // pred_check_branch
      %24 = sbr.rel (0) target = $region9
    $region8: #{tpu_custom_call.1} parent=1 // pred_region
      %25 = dma.done [#allocation3], 8192
    $region9: #{tpu_custom_call.1} parent=1 // pred_fallthru
      _
    %p26 = scmp.eq.s32.totalorder 0, 0
    // Predicated region
    $region10: #{tpu_custom_call.1} parent=1 // pred_check
      %p27 = pneg %p26
    $region11: #{tpu_custom_call.1} parent=1 // pred_check_branch
      %29 = sbr.rel (%p27) target = $region13
    $region12: #{tpu_custom_call.1} parent=1 // pred_region
      %30 = vst [vmem:[#allocation5] sm:$0x1] 0.0
      %31 = vst [vmem:[#allocation6] sm:$0x1] 0.0
    $region13: #{tpu_custom_call.1} parent=1 // pred_fallthru
      _
    %v32 = vld [vmem:[#allocation2] sm:$0xff]
    %v33 = vld [vmem:[#allocation2 + $0x8] sm:$0xff]
    %v34 = vld [vmem:[#allocation2 + $0x10] sm:$0xff]
    %v35 = vld [vmem:[#allocation2 + $0x18] sm:$0xff]
    %v36 = vld [vmem:[#allocation2 + $0x20] sm:$0xff]
    %v37 = vld [vmem:[#allocation2 + $0x28] sm:$0xff]
    %v38 = vld [vmem:[#allocation2 + $0x30] sm:$0xff]
    %v39 = vld [vmem:[#allocation2 + $0x38] sm:$0xff]
    %v40 = vld [vmem:[#allocation2 + $0x40] sm:$0xff]
    %v41 = vld [vmem:[#allocation2 + $0x48] sm:$0xff]
    %v42 = vld [vmem:[#allocation2 + $0x50] sm:$0xff]
    %v43 = vld [vmem:[#allocation2 + $0x58] sm:$0xff]
    %v44 = vld [vmem:[#allocation2 + $0x60] sm:$0xff]
    %v45 = vld [vmem:[#allocation2 + $0x68] sm:$0xff]
    %v46 = vld [vmem:[#allocation2 + $0x70] sm:$0xff]
    %v47 = vld [vmem:[#allocation2 + $0x78] sm:$0xff]
    %v48 = vld [vmem:[#allocation2 + $0x80] sm:$0xff]
    %v49 = vld [vmem:[#allocation2 + $0x88] sm:$0xff]
    %v50 = vld [vmem:[#allocation2 + $0x90] sm:$0xff]
    %v51 = vld [vmem:[#allocation2 + $0x98] sm:$0xff]
    %v52 = vld [vmem:[#allocation2 + $0xa0] sm:$0xff]
    %v53 = vld [vmem:[#allocation2 + $0xa8] sm:$0xff]
    %v54 = vld [vmem:[#allocation2 + $0xb0] sm:$0xff]
    %v55 = vld [vmem:[#allocation2 + $0xb8] sm:$0xff]
    %v56 = vld [vmem:[#allocation2 + $0xc0] sm:$0xff]
    %v57 = vld [vmem:[#allocation2 + $0xc8] sm:$0xff]
    %v58 = vld [vmem:[#allocation2 + $0xd0] sm:$0xff]
    %v59 = vld [vmem:[#allocation2 + $0xd8] sm:$0xff]
    %v60 = vld [vmem:[#allocation2 + $0xe0] sm:$0xff]
    %v61 = vld [vmem:[#allocation2 + $0xe8] sm:$0xff]
    %v62 = vld [vmem:[#allocation2 + $0xf0] sm:$0xff]
    %v63 = vld [vmem:[#allocation2 + $0xf8] sm:$0xff]
    %v64 = vld [vmem:[#allocation2 + $0x100] sm:$0xff]
    %v65 = vld [vmem:[#allocation2 + $0x108] sm:$0xff]
    %v66 = vld [vmem:[#allocation2 + $0x110] sm:$0xff]
    %v67 = vld [vmem:[#allocation2 + $0x118] sm:$0xff]
    %v68 = vld [vmem:[#allocation2 + $0x120] sm:$0xff]
    %v69 = vld [vmem:[#allocation2 + $0x128] sm:$0xff]
    %v70 = vld [vmem:[#allocation2 + $0x130] sm:$0xff]
    %v71 = vld [vmem:[#allocation2 + $0x138] sm:$0xff]
    %v72 = vld [vmem:[#allocation2 + $0x140] sm:$0xff]
    %v73 = vld [vmem:[#allocation2 + $0x148] sm:$0xff]
    %v74 = vld [vmem:[#allocation2 + $0x150] sm:$0xff]
    %v75 = vld [vmem:[#allocation2 + $0x158] sm:$0xff]
    %v76 = vld [vmem:[#allocation2 + $0x160] sm:$0xff]
    %v77 = vld [vmem:[#allocation2 + $0x168] sm:$0xff]
    %v78 = vld [vmem:[#allocation2 + $0x170] sm:$0xff]
    %v79 = vld [vmem:[#allocation2 + $0x178] sm:$0xff]
    %v80 = vld [vmem:[#allocation2 + $0x180] sm:$0xff]
    %v81 = vld [vmem:[#allocation2 + $0x188] sm:$0xff]
    %v82 = vld [vmem:[#allocation2 + $0x190] sm:$0xff]
    %v83 = vld [vmem:[#allocation2 + $0x198] sm:$0xff]
    %v84 = vld [vmem:[#allocation2 + $0x1a0] sm:$0xff]
    %v85 = vld [vmem:[#allocation2 + $0x1a8] sm:$0xff]
    %v86 = vld [vmem:[#allocation2 + $0x1b0] sm:$0xff]
    %v87 = vld [vmem:[#allocation2 + $0x1b8] sm:$0xff]
    %v88 = vld [vmem:[#allocation2 + $0x1c0] sm:$0xff]
    %v89 = vld [vmem:[#allocation2 + $0x1c8] sm:$0xff]
    %v90 = vld [vmem:[#allocation2 + $0x1d0] sm:$0xff]
    %v91 = vld [vmem:[#allocation2 + $0x1d8] sm:$0xff]
    %v92 = vld [vmem:[#allocation2 + $0x1e0] sm:$0xff]
    %v93 = vld [vmem:[#allocation2 + $0x1e8] sm:$0xff]
    %v94 = vld [vmem:[#allocation2 + $0x1f0] sm:$0xff]
    %v95 = vld [vmem:[#allocation2 + $0x1f8] sm:$0xff]
    %v96 = vld [vmem:[#allocation5] sm:$0x1]
    %v97 = vadd.f32 %v32, %v33
    %v98 = vadd.f32 %v97, %v34
    %v99 = vadd.f32 %v98, %v35
    %v100 = vadd.f32 %v99, %v36
    %v101 = vadd.f32 %v100, %v37
    %v102 = vadd.f32 %v101, %v38
    %v103 = vadd.f32 %v102, %v39
    %v104 = vadd.f32 %v103, %v40
    %v105 = vadd.f32 %v104, %v41
    %v106 = vadd.f32 %v105, %v42
    %v107 = vadd.f32 %v106, %v43
    %v108 = vadd.f32 %v107, %v44
    %v109 = vadd.f32 %v108, %v45
    %v110 = vadd.f32 %v109, %v46
    %v111 = vadd.f32 %v110, %v47
    %v112 = vadd.f32 %v111, %v48
    %v113 = vadd.f32 %v112, %v49
    %v114 = vadd.f32 %v113, %v50
    %v115 = vadd.f32 %v114, %v51
    %v116 = vadd.f32 %v115, %v52
    %v117 = vadd.f32 %v116, %v53
    %v118 = vadd.f32 %v117, %v54
    %v119 = vadd.f32 %v118, %v55
    %v120 = vadd.f32 %v119, %v56
    %v121 = vadd.f32 %v120, %v57
    %v122 = vadd.f32 %v121, %v58
    %v123 = vadd.f32 %v122, %v59
    %v124 = vadd.f32 %v123, %v60
    %v125 = vadd.f32 %v124, %v61
    %v126 = vadd.f32 %v125, %v62
    %v127 = vadd.f32 %v126, %v63
    %v128 = vadd.f32 %v127, %v64
    %v129 = vadd.f32 %v128, %v65
    %v130 = vadd.f32 %v129, %v66
    %v131 = vadd.f32 %v130, %v67
    %v132 = vadd.f32 %v131, %v68
    %v133 = vadd.f32 %v132, %v69
    %v134 = vadd.f32 %v133, %v70
    %v135 = vadd.f32 %v134, %v71
    %v136 = vadd.f32 %v135, %v72
    %v137 = vadd.f32 %v136, %v73
    %v138 = vadd.f32 %v137, %v74
    %v139 = vadd.f32 %v138, %v75
    %v140 = vadd.f32 %v139, %v76
    %v141 = vadd.f32 %v140, %v77
    %v142 = vadd.f32 %v141, %v78
    %v143 = vadd.f32 %v142, %v79
    %v144 = vadd.f32 %v143, %v80
    %v145 = vadd.f32 %v144, %v81
    %v146 = vadd.f32 %v145, %v82
    %v147 = vadd.f32 %v146, %v83
    %v148 = vadd.f32 %v147, %v84
    %v149 = vadd.f32 %v148, %v85
    %v150 = vadd.f32 %v149, %v86
    %v151 = vadd.f32 %v150, %v87
    %v152 = vadd.f32 %v151, %v88
    %v153 = vadd.f32 %v152, %v89
    %v154 = vadd.f32 %v153, %v90
    %v155 = vadd.f32 %v154, %v91
    %v156 = vadd.f32 %v155, %v92
    %v157 = vadd.f32 %v156, %v93
    %v158 = vadd.f32 %v157, %v94
    %v159 = vadd.f32 %v158, %v95
    %v160 = vrot.slane %v159, 4
    %v161 = vadd.f32 %v159, %v160
    %v162 = vrot.slane %v161, 2
    %v163 = vadd.f32 %v161, %v162
    %v164 = vrot.slane %v163, 1
    %v165 = vadd.f32 %v163, %v164
    %v166 = vadd.f32 %v96, %v165
    %167 = vst [vmem:[#allocation5] sm:$0x1] %v166
    %v168 = vld [vmem:[#allocation6] sm:$0x1]
    %v169 = vmul.f32 %v32, %v32
    %v170 = vmul.f32 %v33, %v33
    %v171 = vmul.f32 %v34, %v34
    %v172 = vmul.f32 %v35, %v35
    %v173 = vmul.f32 %v36, %v36
    %v174 = vmul.f32 %v37, %v37
    %v175 = vmul.f32 %v38, %v38
    %v176 = vmul.f32 %v39, %v39
    %v177 = vmul.f32 %v40, %v40
    %v178 = vmul.f32 %v41, %v41
    %v179 = vmul.f32 %v42, %v42
    %v180 = vmul.f32 %v43, %v43
    %v181 = vmul.f32 %v44, %v44
    %v182 = vmul.f32 %v45, %v45
    %v183 = vmul.f32 %v46, %v46
    %v184 = vmul.f32 %v47, %v47
    %v185 = vmul.f32 %v48, %v48
    %v186 = vmul.f32 %v49, %v49
    %v187 = vmul.f32 %v50, %v50
    %v188 = vmul.f32 %v51, %v51
    %v189 = vmul.f32 %v52, %v52
    %v190 = vmul.f32 %v53, %v53
    %v191 = vmul.f32 %v54, %v54
    %v192 = vmul.f32 %v55, %v55
    %v193 = vmul.f32 %v56, %v56
    %v194 = vmul.f32 %v57, %v57
    %v195 = vmul.f32 %v58, %v58
    %v196 = vmul.f32 %v59, %v59
    %v197 = vmul.f32 %v60, %v60
    %v198 = vmul.f32 %v61, %v61
    %v199 = vmul.f32 %v62, %v62
    %v200 = vmul.f32 %v63, %v63
    %v201 = vmul.f32 %v64, %v64
    %v202 = vmul.f32 %v65, %v65
    %v203 = vmul.f32 %v66, %v66
    %v204 = vmul.f32 %v67, %v67
    %v205 = vmul.f32 %v68, %v68
    %v206 = vmul.f32 %v69, %v69
    %v207 = vmul.f32 %v70, %v70
    %v208 = vmul.f32 %v71, %v71
    %v209 = vmul.f32 %v72, %v72
    %v210 = vmul.f32 %v73, %v73
    %v211 = vmul.f32 %v74, %v74
    %v212 = vmul.f32 %v75, %v75
    %v213 = vmul.f32 %v76, %v76
    %v214 = vmul.f32 %v77, %v77
    %v215 = vmul.f32 %v78, %v78
    %v216 = vmul.f32 %v79, %v79
    %v217 = vmul.f32 %v80, %v80
    %v218 = vmul.f32 %v81, %v81
    %v219 = vmul.f32 %v82, %v82
    %v220 = vmul.f32 %v83, %v83
    %v221 = vmul.f32 %v84, %v84
    %v222 = vmul.f32 %v85, %v85
    %v223 = vmul.f32 %v86, %v86
    %v224 = vmul.f32 %v87, %v87
    %v225 = vmul.f32 %v88, %v88
    %v226 = vmul.f32 %v89, %v89
    %v227 = vmul.f32 %v90, %v90
    %v228 = vmul.f32 %v91, %v91
    %v229 = vmul.f32 %v92, %v92
    %v230 = vmul.f32 %v93, %v93
    %v231 = vmul.f32 %v94, %v94
    %v232 = vmul.f32 %v95, %v95
    %v233 = vadd.f32 %v169, %v170
    %v234 = vadd.f32 %v233, %v171
    %v235 = vadd.f32 %v234, %v172
    %v236 = vadd.f32 %v235, %v173
    %v237 = vadd.f32 %v236, %v174
    %v238 = vadd.f32 %v237, %v175
    %v239 = vadd.f32 %v238, %v176
    %v240 = vadd.f32 %v239, %v177
    %v241 = vadd.f32 %v240, %v178
    %v242 = vadd.f32 %v241, %v179
    %v243 = vadd.f32 %v242, %v180
    %v244 = vadd.f32 %v243, %v181
    %v245 = vadd.f32 %v244, %v182
    %v246 = vadd.f32 %v245, %v183
    %v247 = vadd.f32 %v246, %v184
    %v248 = vadd.f32 %v247, %v185
    %v249 = vadd.f32 %v248, %v186
    %v250 = vadd.f32 %v249, %v187
    %v251 = vadd.f32 %v250, %v188
    %v252 = vadd.f32 %v251, %v189
    %v253 = vadd.f32 %v252, %v190
    %v254 = vadd.f32 %v253, %v191
    %v255 = vadd.f32 %v254, %v192
    %v256 = vadd.f32 %v255, %v193
    %v257 = vadd.f32 %v256, %v194
    %v258 = vadd.f32 %v257, %v195
    %v259 = vadd.f32 %v258, %v196
    %v260 = vadd.f32 %v259, %v197
    %v261 = vadd.f32 %v260, %v198
    %v262 = vadd.f32 %v261, %v199
    %v263 = vadd.f32 %v262, %v200
    %v264 = vadd.f32 %v263, %v201
    %v265 = vadd.f32 %v264, %v202
    %v266 = vadd.f32 %v265, %v203
    %v267 = vadd.f32 %v266, %v204
    %v268 = vadd.f32 %v267, %v205
    %v269 = vadd.f32 %v268, %v206
    %v270 = vadd.f32 %v269, %v207
    %v271 = vadd.f32 %v270, %v208
    %v272 = vadd.f32 %v271, %v209
    %v273 = vadd.f32 %v272, %v210
    %v274 = vadd.f32 %v273, %v211
    %v275 = vadd.f32 %v274, %v212
    %v276 = vadd.f32 %v275, %v213
    %v277 = vadd.f32 %v276, %v214
    %v278 = vadd.f32 %v277, %v215
    %v279 = vadd.f32 %v278, %v216
    %v280 = vadd.f32 %v279, %v217
    %v281 = vadd.f32 %v280, %v218
    %v282 = vadd.f32 %v281, %v219
    %v283 = vadd.f32 %v282, %v220
    %v284 = vadd.f32 %v283, %v221
    %v285 = vadd.f32 %v284, %v222
    %v286 = vadd.f32 %v285, %v223
    %v287 = vadd.f32 %v286, %v224
    %v288 = vadd.f32 %v287, %v225
    %v289 = vadd.f32 %v288, %v226
    %v290 = vadd.f32 %v289, %v227
    %v291 = vadd.f32 %v290, %v228
    %v292 = vadd.f32 %v291, %v229
    %v293 = vadd.f32 %v292, %v230
    %v294 = vadd.f32 %v293, %v231
    %v295 = vadd.f32 %v294, %v232
    %v296 = vrot.slane %v295, 4
    %v297 = vadd.f32 %v295, %v296
    %v298 = vrot.slane %v297, 2
    %v299 = vadd.f32 %v297, %v298
    %v300 = vrot.slane %v299, 1
    %v301 = vadd.f32 %v299, %v300
    %v302 = vadd.f32 %v168, %v301
    %303 = vst [vmem:[#allocation6] sm:$0x1] %v302
    // Predicated region
    $region14: #{tpu_custom_call.1} parent=1 // pred_check
      _
    $region15: #{tpu_custom_call.1} parent=1 // pred_check_branch
      %305 = sbr.rel (0) target = $region17
    $region16: #{tpu_custom_call.1} parent=1 // pred_region
      %s307 = ssub.s32 16, 16
      %308 = vsyncadd [#allocation4], %s307
      %s310 = sshll.u32 [#allocation5], 4
      %s311 = int_to_ptr.vmem [resolvable:$true] %s310
      %313 = dma.vmem_to_hbm [thread:$0]  %s311, 16, %s1, [#allocation4]
    $region17: #{tpu_custom_call.1} parent=1 // pred_fallthru
      _
    // Predicated region
    $region18: #{tpu_custom_call.1} parent=1 // pred_check
      _
    $region19: #{tpu_custom_call.1} parent=1 // pred_check_branch
      %315 = sbr.rel (0) target = $region21
    $region20: #{tpu_custom_call.1} parent=1 // pred_region
      %s317 = ssub.s32 16, 16
      %318 = vsyncadd [#allocation7], %s317
      %s320 = sshll.u32 [#allocation6], 4
      %s321 = int_to_ptr.vmem [resolvable:$true] %s320
      %323 = dma.vmem_to_hbm [thread:$0]  %s321, 16, %s2, [#allocation7]
    $region21: #{tpu_custom_call.1} parent=1 // pred_fallthru
      _
    // Predicated region
    $region22: #{tpu_custom_call.1} parent=1 // pred_check
      _
    $region23: #{tpu_custom_call.1} parent=1 // pred_check_branch
      %325 = sbr.rel (0) target = $region25
    $region24: #{tpu_custom_call.1} parent=1 // pred_region
      %326 = dma.done [#allocation4], 16
    $region25: #{tpu_custom_call.1} parent=1 // pred_fallthru
      _
    // Predicated region
    $region26: #{tpu_custom_call.1} parent=1 // pred_check
      _
    $region27: #{tpu_custom_call.1} parent=1 // pred_check_branch
      %328 = sbr.rel (0) target = $region29
    $region28: #{tpu_custom_call.1} parent=1 // pred_region
      %329 = dma.done [#allocation7], 16
    $region29: #{tpu_custom_call.1} parent=1 // pred_fallthru
      _
    %330 = vsyncpa [#allocation3], 1
    %331 = vsyncpa [#allocation4], 1
    %332 = vsyncpa [#allocation7], 1

</llo_original>
